<compile_context>
chip_gen: v5e
topology: v5e:2x2
jax: 0.10.0
libtpu: 0.0.40
codegen_flags: <defaults>
</compile_context>

<pallas_src>
import functools

import jax
import jax.numpy as jnp
from jax import lax
from jax.experimental import pallas as pl
from jax.experimental.pallas import tpu as pltpu


def _gather_rows_kernel(idx_ref, in_hbm, out_hbm, sem, *, chunk, nsem, samples):
    """One grid step gathers up to `chunk` rows with up to `nsem` DMAs in flight.

    idx_ref : SMEM (samples,) int32 — scalar-prefetched sampled row indices
    in_hbm  : HBM ref (nrows, F)
    out_hbm : HBM ref (samples, F)
    sem     : DMA semaphore array (nsem,)
    """
    base = pl.program_id(0) * chunk
    # Rows actually handled by this grid step (last chunk may be partial).
    n_rows = jnp.minimum(chunk, samples - base)

    def start_copy(out_row, src_row, slot):
        pltpu.make_async_copy(in_hbm.at[src_row], out_hbm.at[out_row],
                              sem.at[slot]).start()

    def wait_slot(slot):
        # All row copies move the same number of bytes, so a dummy descriptor
        # (row 0 -> row 0) is enough to wait on the semaphore; no SMEM read.
        pltpu.make_async_copy(in_hbm.at[0], out_hbm.at[0], sem.at[slot]).wait()

    # Prologue: put up to `nsem` row copies in flight (only real rows).
    n_prologue = min(nsem, chunk)
    for r in range(n_prologue):
        @pl.when(r < n_rows)
        def _(r=r):
            start_copy(base + r, idx_ref[base + r], r)

    # Steady state: wait row r, immediately refill its semaphore slot with
    # row r + nsem (if any).  Every started DMA is waited within this step.
    def body(r, carry):
        slot = r % nsem
        # Hoist the next row's scalar index read above the wait
        # (.wait() breaks SMEM sst->sld forwarding).  Clamp keeps it in-bounds.
        r_next = jnp.minimum(r + nsem, n_rows - 1)
        src_next = idx_ref[base + r_next]

        wait_slot(slot)

        @pl.when(r + nsem < n_rows)
        def _():
            start_copy(base + r + nsem, src_next, slot)

        return carry

    lax.fori_loop(0, n_rows, body, 0)


def random_sampler_forward(input_x: jax.Array, samples: int, key: jax.Array,
                           *, chunk: int = 256, nsem: int = 16) -> jax.Array:
    """Pallas implementation of RandomSampler.forward.

    input_x: (nrows, ncolumns, x)
    returns: (samples, ncolumns, x) if nrows >= samples else input_x
    """
    nrows, ncolumns, xdim = input_x.shape

    # Static shape check mirrors the PyTorch early-return.
    if nrows < samples:
        return input_x
    if samples == 0:
        return input_x[:0]

    # Glue: random sample without replacement, sorted ascending (matches
    # random.sample(...) + idx.sort() in the reference module).
    idx = jax.random.choice(key, nrows, shape=(samples,), replace=False)
    idx = jnp.sort(idx).astype(jnp.int32)

    feat = ncolumns * xdim
    x_flat = input_x.reshape(nrows, feat)          # contiguous rows

    chunk = max(1, min(chunk, samples))
    nsem = max(1, min(nsem, chunk))
    num_chunks = pl.cdiv(samples, chunk)

    dtype_bytes = jnp.dtype(input_x.dtype).itemsize

    kernel = functools.partial(_gather_rows_kernel,
                               chunk=chunk, nsem=nsem, samples=samples)

    out = pl.pallas_call(
        kernel,
        out_shape=jax.ShapeDtypeStruct((samples, feat), input_x.dtype),
        grid_spec=pltpu.PrefetchScalarGridSpec(
            num_scalar_prefetch=1,                 # idx lands in SMEM
            grid=(num_chunks,),
            in_specs=[pl.BlockSpec(memory_space=pl.ANY)],   # raw HBM, manual DMA
            out_specs=pl.BlockSpec(memory_space=pl.ANY),    # raw HBM, manual DMA
            scratch_shapes=[pltpu.SemaphoreType.DMA((nsem,))],
        ),
        compiler_params=pltpu.CompilerParams(
            dimension_semantics=("parallel",),     # chunks independent; v7x 2-TC
        ),
        cost_estimate=pl.CostEstimate(
            flops=0,
            transcendentals=0,
            bytes_accessed=2 * samples * feat * dtype_bytes,
        ),
    )(idx, x_flat)

    return out.reshape(samples, ncolumns, xdim)


if __name__ == "__main__":
    key = jax.random.PRNGKey(0)
    k_data, k_sample = jax.random.split(key)

    # Small shapes consistent with the module: (nrows, ncolumns, x)
    nrows, ncolumns, xdim = 32, 8, 128
    samples = 20

    input_x = jax.random.normal(k_data, (nrows, ncolumns, xdim), dtype=jnp.float32)

    # chunk=8 with samples=20 exercises multiple grid steps + a partial tail.
    out = random_sampler_forward(input_x, samples, k_sample, chunk=8, nsem=4)
    out = jax.block_until_ready(out)

    # Correctness check against plain-JAX reference gather (same key / glue).
    idx_ref = jnp.sort(
        jax.random.choice(k_sample, nrows, shape=(samples,), replace=False)
    ).astype(jnp.int32)
    expected = input_x[idx_ref]
    assert out.shape == (samples, ncolumns, xdim)
    assert jnp.allclose(out, expected)

    # Default (single-chunk) configuration also matches.
    out2 = jax.block_until_ready(random_sampler_forward(input_x, samples, k_sample))
    assert jnp.allclose(out2, expected)

    # Early-return path (nrows < samples) returns the input unchanged.
    small = input_x[:4]
    same = random_sampler_forward(small, samples, k_sample)
    assert same is small

    print("KERNEL_OK")
</pallas_src>

<mosaic_0001>
module attributes {stable_mosaic.version = 11 : i64} {
  func.func @_gather_rows_kernel(%arg0: i32, %arg1: memref<20xi32, #tpu.memory_space<smem>>, %arg2: memref<32x1024xf32, #tpu.memory_space<any>>, %arg3: memref<20x1024xf32, #tpu.memory_space<any>>, %arg4: memref<4x!tpu.dma_semaphore, #tpu.memory_space<semaphore_mem>>) attributes {dimension_semantics = [#tpu.dimension_semantics<parallel>], iteration_bounds = array<i64: 3>, scalar_prefetch = 1 : i64, scratch_operands = 1 : i64, tpu.core_type = #tpu.core_type<tc>, window_params = [{}, {}]} {
    %c8_i32 = arith.constant 8 : i32
    %0 = arith.muli %arg0, %c8_i32 : i32
    %c20_i32 = arith.constant 20 : i32
    %1 = arith.subi %c20_i32, %0 : i32
    %c8_i32_0 = arith.constant 8 : i32
    %2 = arith.minsi %c8_i32_0, %1 : i32
    %c0_i32 = arith.constant 0 : i32
    %3 = arith.cmpi sgt, %2, %c0_i32 : i32
    %4 = arith.extui %3 : i1 to i32
    %c0_i32_1 = arith.constant 0 : i32
    %5 = arith.cmpi ne, %4, %c0_i32_1 : i32
    scf.if %5 {
      %c0_i32_8 = arith.constant 0 : i32
      %17 = arith.addi %0, %c0_i32_8 : i32
      %c0_i32_9 = arith.constant 0 : i32
      %18 = arith.addi %0, %c0_i32_9 : i32
      %19 = arith.index_cast %18 : i32 to index
      %20 = memref.load %arg1[%19] : memref<20xi32, #tpu.memory_space<smem>>
      %c0_i32_10 = arith.constant 0 : i32
      %c0_i32_11 = arith.constant 0 : i32
      %21 = tpu.memref_slice %arg2[%20, %c0_i32_11] : memref<32x1024xf32, #tpu.memory_space<any>> -> memref<1x1024xf32, #tpu.memory_space<any>>
      %22 = tpu.memref_squeeze %21 : memref<1x1024xf32, #tpu.memory_space<any>> -> memref<1024xf32, #tpu.memory_space<any>>
      %c0_i32_12 = arith.constant 0 : i32
      %23 = tpu.memref_slice %arg3[%17, %c0_i32_12] : memref<20x1024xf32, #tpu.memory_space<any>> -> memref<1x1024xf32, #tpu.memory_space<any>>
      %24 = tpu.memref_squeeze %23 : memref<1x1024xf32, #tpu.memory_space<any>> -> memref<1024xf32, #tpu.memory_space<any>>
      %25 = tpu.memref_slice %arg4[%c0_i32_10] : memref<4x!tpu.dma_semaphore, #tpu.memory_space<semaphore_mem>> -> memref<1x!tpu.dma_semaphore, #tpu.memory_space<semaphore_mem>>
      %26 = tpu.memref_squeeze %25 : memref<1x!tpu.dma_semaphore, #tpu.memory_space<semaphore_mem>> -> memref<!tpu.dma_semaphore, #tpu.memory_space<semaphore_mem>>
      tpu.enqueue_dma source(%22 : memref<1024xf32, #tpu.memory_space<any>>) target(%24 : memref<1024xf32, #tpu.memory_space<any>>) target_semaphore(%26 : memref<!tpu.dma_semaphore, #tpu.memory_space<semaphore_mem>>)
    } else {
    }
    %c1_i32 = arith.constant 1 : i32
    %6 = arith.cmpi sgt, %2, %c1_i32 : i32
    %7 = arith.extui %6 : i1 to i32
    %c0_i32_2 = arith.constant 0 : i32
    %8 = arith.cmpi ne, %7, %c0_i32_2 : i32
    scf.if %8 {
      %c1_i32_8 = arith.constant 1 : i32
      %17 = arith.addi %0, %c1_i32_8 : i32
      %c1_i32_9 = arith.constant 1 : i32
      %18 = arith.addi %0, %c1_i32_9 : i32
      %19 = arith.index_cast %18 : i32 to index
      %20 = memref.load %arg1[%19] : memref<20xi32, #tpu.memory_space<smem>>
      %c1_i32_10 = arith.constant 1 : i32
      %c0_i32_11 = arith.constant 0 : i32
      %21 = tpu.memref_slice %arg2[%20, %c0_i32_11] : memref<32x1024xf32, #tpu.memory_space<any>> -> memref<1x1024xf32, #tpu.memory_space<any>>
      %22 = tpu.memref_squeeze %21 : memref<1x1024xf32, #tpu.memory_space<any>> -> memref<1024xf32, #tpu.memory_space<any>>
      %c0_i32_12 = arith.constant 0 : i32
      %23 = tpu.memref_slice %arg3[%17, %c0_i32_12] : memref<20x1024xf32, #tpu.memory_space<any>> -> memref<1x1024xf32, #tpu.memory_space<any>>
      %24 = tpu.memref_squeeze %23 : memref<1x1024xf32, #tpu.memory_space<any>> -> memref<1024xf32, #tpu.memory_space<any>>
      %25 = tpu.memref_slice %arg4[%c1_i32_10] : memref<4x!tpu.dma_semaphore, #tpu.memory_space<semaphore_mem>> -> memref<1x!tpu.dma_semaphore, #tpu.memory_space<semaphore_mem>>
      %26 = tpu.memref_squeeze %25 : memref<1x!tpu.dma_semaphore, #tpu.memory_space<semaphore_mem>> -> memref<!tpu.dma_semaphore, #tpu.memory_space<semaphore_mem>>
      tpu.enqueue_dma source(%22 : memref<1024xf32, #tpu.memory_space<any>>) target(%24 : memref<1024xf32, #tpu.memory_space<any>>) target_semaphore(%26 : memref<!tpu.dma_semaphore, #tpu.memory_space<semaphore_mem>>)
    } else {
    }
    %c2_i32 = arith.constant 2 : i32
    %9 = arith.cmpi sgt, %2, %c2_i32 : i32
    %10 = arith.extui %9 : i1 to i32
    %c0_i32_3 = arith.constant 0 : i32
    %11 = arith.cmpi ne, %10, %c0_i32_3 : i32
    scf.if %11 {
      %c2_i32_8 = arith.constant 2 : i32
      %17 = arith.addi %0, %c2_i32_8 : i32
      %c2_i32_9 = arith.constant 2 : i32
      %18 = arith.addi %0, %c2_i32_9 : i32
      %19 = arith.index_cast %18 : i32 to index
      %20 = memref.load %arg1[%19] : memref<20xi32, #tpu.memory_space<smem>>
      %c2_i32_10 = arith.constant 2 : i32
      %c0_i32_11 = arith.constant 0 : i32
      %21 = tpu.memref_slice %arg2[%20, %c0_i32_11] : memref<32x1024xf32, #tpu.memory_space<any>> -> memref<1x1024xf32, #tpu.memory_space<any>>
      %22 = tpu.memref_squeeze %21 : memref<1x1024xf32, #tpu.memory_space<any>> -> memref<1024xf32, #tpu.memory_space<any>>
      %c0_i32_12 = arith.constant 0 : i32
      %23 = tpu.memref_slice %arg3[%17, %c0_i32_12] : memref<20x1024xf32, #tpu.memory_space<any>> -> memref<1x1024xf32, #tpu.memory_space<any>>
      %24 = tpu.memref_squeeze %23 : memref<1x1024xf32, #tpu.memory_space<any>> -> memref<1024xf32, #tpu.memory_space<any>>
      %25 = tpu.memref_slice %arg4[%c2_i32_10] : memref<4x!tpu.dma_semaphore, #tpu.memory_space<semaphore_mem>> -> memref<1x!tpu.dma_semaphore, #tpu.memory_space<semaphore_mem>>
      %26 = tpu.memref_squeeze %25 : memref<1x!tpu.dma_semaphore, #tpu.memory_space<semaphore_mem>> -> memref<!tpu.dma_semaphore, #tpu.memory_space<semaphore_mem>>
      tpu.enqueue_dma source(%22 : memref<1024xf32, #tpu.memory_space<any>>) target(%24 : memref<1024xf32, #tpu.memory_space<any>>) target_semaphore(%26 : memref<!tpu.dma_semaphore, #tpu.memory_space<semaphore_mem>>)
    } else {
    }
    %c3_i32 = arith.constant 3 : i32
    %12 = arith.cmpi sgt, %2, %c3_i32 : i32
    %13 = arith.extui %12 : i1 to i32
    %c0_i32_4 = arith.constant 0 : i32
    %14 = arith.cmpi ne, %13, %c0_i32_4 : i32
    scf.if %14 {
      %c3_i32_8 = arith.constant 3 : i32
      %17 = arith.addi %0, %c3_i32_8 : i32
      %c3_i32_9 = arith.constant 3 : i32
      %18 = arith.addi %0, %c3_i32_9 : i32
      %19 = arith.index_cast %18 : i32 to index
      %20 = memref.load %arg1[%19] : memref<20xi32, #tpu.memory_space<smem>>
      %c3_i32_10 = arith.constant 3 : i32
      %c0_i32_11 = arith.constant 0 : i32
      %21 = tpu.memref_slice %arg2[%20, %c0_i32_11] : memref<32x1024xf32, #tpu.memory_space<any>> -> memref<1x1024xf32, #tpu.memory_space<any>>
      %22 = tpu.memref_squeeze %21 : memref<1x1024xf32, #tpu.memory_space<any>> -> memref<1024xf32, #tpu.memory_space<any>>
      %c0_i32_12 = arith.constant 0 : i32
      %23 = tpu.memref_slice %arg3[%17, %c0_i32_12] : memref<20x1024xf32, #tpu.memory_space<any>> -> memref<1x1024xf32, #tpu.memory_space<any>>
      %24 = tpu.memref_squeeze %23 : memref<1x1024xf32, #tpu.memory_space<any>> -> memref<1024xf32, #tpu.memory_space<any>>
      %25 = tpu.memref_slice %arg4[%c3_i32_10] : memref<4x!tpu.dma_semaphore, #tpu.memory_space<semaphore_mem>> -> memref<1x!tpu.dma_semaphore, #tpu.memory_space<semaphore_mem>>
      %26 = tpu.memref_squeeze %25 : memref<1x!tpu.dma_semaphore, #tpu.memory_space<semaphore_mem>> -> memref<!tpu.dma_semaphore, #tpu.memory_space<semaphore_mem>>
      tpu.enqueue_dma source(%22 : memref<1024xf32, #tpu.memory_space<any>>) target(%24 : memref<1024xf32, #tpu.memory_space<any>>) target_semaphore(%26 : memref<!tpu.dma_semaphore, #tpu.memory_space<semaphore_mem>>)
    } else {
    }
    %c0_i32_5 = arith.constant 0 : i32
    %c0_i32_6 = arith.constant 0 : i32
    %15 = arith.subi %2, %c0_i32_6 : i32
    %16 = arith.addi %c0_i32_6, %15 : i32
    %c1_i32_7 = arith.constant 1 : i32
    scf.for %arg5 = %c0_i32_6 to %16 step %c1_i32_7  : i32 {
      %c4_i32 = arith.constant 4 : i32
      %c0_i32_8 = arith.constant 0 : i32
      %17 = arith.cmpi eq, %c4_i32, %c0_i32_8 : i32
      %c1_i32_9 = arith.constant 1 : i32
      %18 = arith.select %17, %c1_i32_9, %c4_i32 : i32
      %19 = arith.remsi %arg5, %18 : i32
      %c0_i32_10 = arith.constant 0 : i32
      %20 = arith.cmpi ne, %19, %c0_i32_10 : i32
      %c0_i32_11 = arith.constant 0 : i32
      %21 = arith.cmpi slt, %19, %c0_i32_11 : i32
      %c0_i32_12 = arith.constant 0 : i32
      %22 = arith.cmpi slt, %18, %c0_i32_12 : i32
      %23 = arith.xori %21, %22 : i1
      %24 = arith.andi %23, %20 : i1
      %25 = arith.addi %19, %18 : i32
      %26 = arith.select %24, %25, %19 : i32
      %c4_i32_13 = arith.constant 4 : i32
      %27 = arith.addi %arg5, %c4_i32_13 : i32
      %c1_i32_14 = arith.constant 1 : i32
      %28 = arith.subi %2, %c1_i32_14 : i32
      %29 = arith.minsi %27, %28 : i32
      %30 = arith.addi %0, %29 : i32
      %31 = arith.index_cast %30 : i32 to index
      %32 = memref.load %arg1[%31] : memref<20xi32, #tpu.memory_space<smem>>
      %c0_i32_15 = arith.constant 0 : i32
      %c0_i32_16 = arith.constant 0 : i32
      %c0_i32_17 = arith.constant 0 : i32
      %33 = tpu.memref_slice %arg2[%c0_i32_15, %c0_i32_17] : memref<32x1024xf32, #tpu.memory_space<any>> -> memref<1x1024xf32, #tpu.memory_space<any>>
      %34 = tpu.memref_squeeze %33 : memref<1x1024xf32, #tpu.memory_space<any>> -> memref<1024xf32, #tpu.memory_space<any>>
      %c0_i32_18 = arith.constant 0 : i32
      %35 = tpu.memref_slice %arg3[%c0_i32_16, %c0_i32_18] : memref<20x1024xf32, #tpu.memory_space<any>> -> memref<1x1024xf32, #tpu.memory_space<any>>
      %36 = tpu.memref_squeeze %35 : memref<1x1024xf32, #tpu.memory_space<any>> -> memref<1024xf32, #tpu.memory_space<any>>
      %37 = tpu.memref_slice %arg4[%26] : memref<4x!tpu.dma_semaphore, #tpu.memory_space<semaphore_mem>> -> memref<1x!tpu.dma_semaphore, #tpu.memory_space<semaphore_mem>>
      %38 = tpu.memref_squeeze %37 : memref<1x!tpu.dma_semaphore, #tpu.memory_space<semaphore_mem>> -> memref<!tpu.dma_semaphore, #tpu.memory_space<semaphore_mem>>
      tpu.wait_dma2 semaphore(%38 : memref<!tpu.dma_semaphore, #tpu.memory_space<semaphore_mem>>) src(%34 : memref<1024xf32, #tpu.memory_space<any>>) dst(%36 : memref<1024xf32, #tpu.memory_space<any>>)
      %c4_i32_19 = arith.constant 4 : i32
      %39 = arith.addi %arg5, %c4_i32_19 : i32
      %40 = arith.cmpi slt, %39, %2 : i32
      %41 = arith.extui %40 : i1 to i32
      %c0_i32_20 = arith.constant 0 : i32
      %42 = arith.cmpi ne, %41, %c0_i32_20 : i32
      scf.if %42 {
        %43 = arith.addi %0, %arg5 : i32
        %c4_i32_21 = arith.constant 4 : i32
        %44 = arith.addi %43, %c4_i32_21 : i32
        %c0_i32_22 = arith.constant 0 : i32
        %45 = tpu.memref_slice %arg2[%32, %c0_i32_22] : memref<32x1024xf32, #tpu.memory_space<any>> -> memref<1x1024xf32, #tpu.memory_space<any>>
        %46 = tpu.memref_squeeze %45 : memref<1x1024xf32, #tpu.memory_space<any>> -> memref<1024xf32, #tpu.memory_space<any>>
        %c0_i32_23 = arith.constant 0 : i32
        %47 = tpu.memref_slice %arg3[%44, %c0_i32_23] : memref<20x1024xf32, #tpu.memory_space<any>> -> memref<1x1024xf32, #tpu.memory_space<any>>
        %48 = tpu.memref_squeeze %47 : memref<1x1024xf32, #tpu.memory_space<any>> -> memref<1024xf32, #tpu.memory_space<any>>
        %49 = tpu.memref_slice %arg4[%26] : memref<4x!tpu.dma_semaphore, #tpu.memory_space<semaphore_mem>> -> memref<1x!tpu.dma_semaphore, #tpu.memory_space<semaphore_mem>>
        %50 = tpu.memref_squeeze %49 : memref<1x!tpu.dma_semaphore, #tpu.memory_space<semaphore_mem>> -> memref<!tpu.dma_semaphore, #tpu.memory_space<semaphore_mem>>
        tpu.enqueue_dma source(%46 : memref<1024xf32, #tpu.memory_space<any>>) target(%48 : memref<1024xf32, #tpu.memory_space<any>>) target_semaphore(%50 : memref<!tpu.dma_semaphore, #tpu.memory_space<semaphore_mem>>)
      } else {
      }
    }
    return
  }
}

</mosaic_0001>

<llo_original>
// kernel: tpu_custom_call.1
$region0: #{tpu_custom_call.1}
  #allocation0 [shape = 'u32[]', space=smem, size = 0x4, offset = 0x4, fixed_abs, tag = 'smem constant byte address 0x4 - core index']
  #allocation1 [shape = 'u32[72,128]{1,0:T(1,128)}', space=vmem, size = 0x9000, scoped, tag = 'internal scratch']
  #allocation2 [shape = 's32[4]{0}', space=sflag, size = 0x10, scoped, tag = 'scratch operand']
  #allocation3 [shape = 's32[1]{0}', space=sflag, size = 0x4, scoped, tag = 'scoped memory for tpu_custom_call.1']
  #allocation4 [shape = 'u8[512]{0}', space=smem, size = 0x200, scoped, tag = 'prefetched SMEM operand 0']
  #allocation5 [shape = 's32[]', space=sflag, size = 0x4, offset = 0, fixed_abs, tag = 'sflag constant byte address 0x0 - dummy sync flag']
  #allocation7 [shape = 's32[]', space=sflag, size = 0x4, offset = 0, fixed_abs, tag = 'sflag constant byte address 0x0 - dummy sync flag']
  #allocation9 [shape = 's32[]', space=sflag, size = 0x4, offset = 0, fixed_abs, tag = 'sflag constant byte address 0x0 - dummy sync flag']
  #allocation11 [shape = 's32[]', space=sflag, size = 0x4, offset = 0, fixed_abs, tag = 'sflag constant byte address 0x0 - dummy sync flag']
  #allocation13 [shape = 's32[]', space=sflag, size = 0x4, offset = 0, fixed_abs, tag = 'sflag constant byte address 0x0 - dummy sync flag']
  %s0 = inlined_call_operand.hbm [shape: s32[20], index: 0, kind: input, shape index: {}]
  %s1 = inlined_call_operand.hbm [shape: f32[32,1024], index: 1, kind: input, shape index: {}]
  %s2 = inlined_call_operand.hbm [shape: f32[20,1024], index: 2, kind: output, shape index: {}]
  %s3 = sld [smem:[#allocation0]]
  $region36: #{tpu_custom_call.1} parent=0
    _
  %s5 = ssub.s32 1, %s3
  %s6 = scalar_select 0, %s5, %s3
  %s8 = sshll.u32 %s0, 4
  %s9 = int_to_ptr.hbm [resolvable:$true] %s8
  %11 = dma.hbm_to_smem %s9, 16, [#allocation4], [#allocation3]
  %13 = dma.done [#allocation3], 16
  %14 = sfence
  loop: start=0, step=1, limit=3
  $region2: #{tpu_custom_call.1} parent=0 // loop_pre_header
    _
  $region3: #{tpu_custom_call.1} parent=0 // loop_header
    %s16 = sphi 0, %s20
    %p17 = scmp.ge.s32.totalorder %s16, 3
  $region4: #{tpu_custom_call.1} parent=0 // loop_header_branch
    %19 = sbr.rel (%p17) target = $region8
  $region5: #{tpu_custom_call.1} parent=0 // loop_body
    %s21 = sadd.s32 %s16, 1
    %s22 = smul.u32 %s16, 8
    %s23 = ssub.s32 20, %s22
    %p24 = scmp.lt.s32.totalorder %s23, 8
    %s25 = scalar_select %p24, %s23, 8
    %p26 = scmp.gt.s32.totalorder %s25, 0
    // Predicated region
    $region9: #{tpu_custom_call.1} parent=5 // pred_check
      %p27 = pneg %p26
    $region10: #{tpu_custom_call.1} parent=5 // pred_check_branch
      %29 = sbr.rel (%p27) target = $region12
    $region11: #{tpu_custom_call.1} parent=5 // pred_region
      #allocation6 [shape = 'u32[3]{0}', space=smem, size = 0xc, scoped, tag = 'DMA stride descriptor']
      %s30 = sld [smem:[#allocation4 + %s22]]
      %s31 = sshrl.u32 %s30, 3
      %s32 = sand.u32 %s30, 7
      %s33 = smul.u32 %s31, 64
      %s34 = sadd.s32 %s32, %s33
      %s35 = scalar_lea.hbm %s1, %s34
      %s36 = sshrl.u32 %s22, 3
      %s37 = sand.u32 %s22, 7
      %s38 = smul.u32 %s36, 64
      %s39 = sadd.s32 %s37, %s38
      %s40 = scalar_lea.hbm %s2, %s39
      %s42 = sshll.u32 1, 14
      %s43 = sxor.u32 4294967295, %s42
      %s45 = sshll.u32 %s35, 4
      %s46 = int_to_ptr.hbm [resolvable:$true] %s45
      %s47 = sshll.u32 %s40, 4
      %s48 = int_to_ptr.hbm [resolvable:$true] %s47
      %52 = sst [smem:[#allocation6]] 128
      %s53 = scalar_lea.smem [#allocation6], 1
      %54 = sst [smem:[%s53]] 128
      %s55 = scalar_lea.smem [#allocation6], 2
      %56 = sst [smem:[%s55]] 1
      %58 = dma.general %s46, 128, %s48, [#allocation2], [#allocation5], [#allocation6], 0, 0
    $region12: #{tpu_custom_call.1} parent=5 // pred_fallthru
      _
    %p59 = scmp.gt.s32.totalorder %s25, 1
    // Predicated region
    $region13: #{tpu_custom_call.1} parent=5 // pred_check
      %p60 = pneg %p59
    $region14: #{tpu_custom_call.1} parent=5 // pred_check_branch
      %62 = sbr.rel (%p60) target = $region16
    $region15: #{tpu_custom_call.1} parent=5 // pred_region
      #allocation8 [shape = 'u32[3]{0}', space=smem, size = 0xc, scoped, tag = 'DMA stride descriptor']
      %s63 = sadd.s32 %s22, 1
      %s64 = sld [smem:[#allocation4 + %s63]]
      %s65 = sshrl.u32 %s64, 3
      %s66 = sand.u32 %s64, 7
      %s67 = smul.u32 %s65, 64
      %s68 = sadd.s32 %s66, %s67
      %s69 = scalar_lea.hbm %s1, %s68
      %s70 = sshrl.u32 %s63, 3
      %s71 = sand.u32 %s63, 7
      %s72 = smul.u32 %s70, 64
      %s73 = sadd.s32 %s71, %s72
      %s74 = scalar_lea.hbm %s2, %s73
      %s75 = scalar_lea.sflag [#allocation2], 1
      %s77 = sshll.u32 1, 14
      %s78 = sxor.u32 4294967295, %s77
      %s80 = sshll.u32 %s69, 4
      %s81 = int_to_ptr.hbm [resolvable:$true] %s80
      %s82 = sshll.u32 %s74, 4
      %s83 = int_to_ptr.hbm [resolvable:$true] %s82
      %87 = sst [smem:[#allocation8]] 128
      %s88 = scalar_lea.smem [#allocation8], 1
      %89 = sst [smem:[%s88]] 128
      %s90 = scalar_lea.smem [#allocation8], 2
      %91 = sst [smem:[%s90]] 1
      %93 = dma.general %s81, 128, %s83, %s75, [#allocation7], [#allocation8], 0, 0
    $region16: #{tpu_custom_call.1} parent=5 // pred_fallthru
      _
    %p94 = scmp.gt.s32.totalorder %s25, 2
    // Predicated region
    $region17: #{tpu_custom_call.1} parent=5 // pred_check
      %p95 = pneg %p94
    $region18: #{tpu_custom_call.1} parent=5 // pred_check_branch
      %97 = sbr.rel (%p95) target = $region20
    $region19: #{tpu_custom_call.1} parent=5 // pred_region
      #allocation10 [shape = 'u32[3]{0}', space=smem, size = 0xc, scoped, tag = 'DMA stride descriptor']
      %s98 = sadd.s32 %s22, 2
      %s99 = sld [smem:[#allocation4 + %s98]]
      %s100 = sshrl.u32 %s99, 3
      %s101 = sand.u32 %s99, 7
      %s102 = smul.u32 %s100, 64
      %s103 = sadd.s32 %s101, %s102
      %s104 = scalar_lea.hbm %s1, %s103
      %s105 = sshrl.u32 %s98, 3
      %s106 = sand.u32 %s98, 7
      %s107 = smul.u32 %s105, 64
      %s108 = sadd.s32 %s106, %s107
      %s109 = scalar_lea.hbm %s2, %s108
      %s110 = scalar_lea.sflag [#allocation2], 2
      %s112 = sshll.u32 1, 14
      %s113 = sxor.u32 4294967295, %s112
      %s115 = sshll.u32 %s104, 4
      %s116 = int_to_ptr.hbm [resolvable:$true] %s115
      %s117 = sshll.u32 %s109, 4
      %s118 = int_to_ptr.hbm [resolvable:$true] %s117
      %122 = sst [smem:[#allocation10]] 128
      %s123 = scalar_lea.smem [#allocation10], 1
      %124 = sst [smem:[%s123]] 128
      %s125 = scalar_lea.smem [#allocation10], 2
      %126 = sst [smem:[%s125]] 1
      %128 = dma.general %s116, 128, %s118, %s110, [#allocation9], [#allocation10], 0, 0
    $region20: #{tpu_custom_call.1} parent=5 // pred_fallthru
      _
    %p129 = scmp.gt.s32.totalorder %s25, 3
    // Predicated region
    $region21: #{tpu_custom_call.1} parent=5 // pred_check
      %p130 = pneg %p129
    $region22: #{tpu_custom_call.1} parent=5 // pred_check_branch
      %132 = sbr.rel (%p130) target = $region24
    $region23: #{tpu_custom_call.1} parent=5 // pred_region
      #allocation12 [shape = 'u32[3]{0}', space=smem, size = 0xc, scoped, tag = 'DMA stride descriptor']
      %s133 = sadd.s32 %s22, 3
      %s134 = sld [smem:[#allocation4 + %s133]]
      %s135 = sshrl.u32 %s134, 3
      %s136 = sand.u32 %s134, 7
      %s137 = smul.u32 %s135, 64
      %s138 = sadd.s32 %s136, %s137
      %s139 = scalar_lea.hbm %s1, %s138
      %s140 = sshrl.u32 %s133, 3
      %s141 = sand.u32 %s133, 7
      %s142 = smul.u32 %s140, 64
      %s143 = sadd.s32 %s141, %s142
      %s144 = scalar_lea.hbm %s2, %s143
      %s145 = scalar_lea.sflag [#allocation2], 3
      %s147 = sshll.u32 1, 14
      %s148 = sxor.u32 4294967295, %s147
      %s150 = sshll.u32 %s139, 4
      %s151 = int_to_ptr.hbm [resolvable:$true] %s150
      %s152 = sshll.u32 %s144, 4
      %s153 = int_to_ptr.hbm [resolvable:$true] %s152
      %157 = sst [smem:[#allocation12]] 128
      %s158 = scalar_lea.smem [#allocation12], 1
      %159 = sst [smem:[%s158]] 128
      %s160 = scalar_lea.smem [#allocation12], 2
      %161 = sst [smem:[%s160]] 1
      %163 = dma.general %s151, 128, %s153, %s145, [#allocation11], [#allocation12], 0, 0
    $region24: #{tpu_custom_call.1} parent=5 // pred_fallthru
      _
    // While loop
    $region25: #{tpu_custom_call.1} parent=5 // loop_pre_header
      _
    $region26: #{tpu_custom_call.1} parent=5 // loop_header
      %s165 = sphi 0, %s167
      %p166 = scmp.ge.s32.totalorder %s165, %s25
    $region27: #{tpu_custom_call.1} parent=5 // loop_header_branch
      %169 = sbr.rel (%p166) target = $region31
    $region28: #{tpu_custom_call.1} parent=5 // loop_body
      %p170 = scmp.lt.s32.totalorder %s165, 0
      %s171 = ssub.s32 0, %s165
      %s172 = scalar_select %p170, %s171, %s165
      %s173 = sand.u32 %s172, 3
      %s174 = ssub.s32 0, %s173
      %s175 = scalar_select %p170, %s174, %s173
      %p176 = scmp.ne.s32.totalorder %s175, 0
      %p177 = scmp.lt.s32.totalorder %s175, 0
      %p178 = pnand %p177, %p176
      %p179 = pneg %p178
      %s180 = sadd.s32 %s175, 4
      %s181 = scalar_select %p179, %s180, %s175
      %s182 = sadd.s32 %s165, 4
      %s183 = ssub.s32 %s25, 1
      %p184 = scmp.lt.s32.totalorder %s182, %s183
      %s185 = scalar_select %p184, %s182, %s183
      %s186 = sadd.s32 %s22, %s185
      %s187 = sld [smem:[#allocation4 + %s186]]
      %s188 = scalar_lea.sflag [#allocation2], %s181
      %190 = dma.done %s188, 128
      %p191 = scmp.lt.s32.totalorder %s182, %s25
      // Predicated region
      $region32: #{tpu_custom_call.1} parent=28 // pred_check
        %p192 = pneg %p191
      $region33: #{tpu_custom_call.1} parent=28 // pred_check_branch
        %194 = sbr.rel (%p192) target = $region35
      $region34: #{tpu_custom_call.1} parent=28 // pred_region
        #allocation14 [shape = 'u32[3]{0}', space=smem, size = 0xc, scoped, tag = 'DMA stride descriptor']
        %s195 = sadd.s32 %s22, %s165
        %s196 = sadd.s32 %s195, 4
        %s197 = sshrl.u32 %s187, 3
        %s198 = sand.u32 %s187, 7
        %s199 = smul.u32 %s197, 64
        %s200 = sadd.s32 %s198, %s199
        %s201 = scalar_lea.hbm %s1, %s200
        %s202 = sshrl.u32 %s196, 3
        %s203 = sand.u32 %s196, 7
        %s204 = smul.u32 %s202, 64
        %s205 = sadd.s32 %s203, %s204
        %s206 = scalar_lea.hbm %s2, %s205
        %s208 = sshll.u32 1, 14
        %s209 = sxor.u32 4294967295, %s208
        %s211 = sshll.u32 %s201, 4
        %s212 = int_to_ptr.hbm [resolvable:$true] %s211
        %s213 = sshll.u32 %s206, 4
        %s214 = int_to_ptr.hbm [resolvable:$true] %s213
        %218 = sst [smem:[#allocation14]] 128
        %s219 = scalar_lea.smem [#allocation14], 1
        %220 = sst [smem:[%s219]] 128
        %s221 = scalar_lea.smem [#allocation14], 2
        %222 = sst [smem:[%s221]] 1
        %224 = dma.general %s212, 128, %s214, %s188, [#allocation13], [#allocation14], 0, 0
      $region35: #{tpu_custom_call.1} parent=28 // pred_fallthru
        _
    $region29: #{tpu_custom_call.1} parent=5 // loop_footer
      %s167 = sadd.s32 %s165, 1
    $region30: #{tpu_custom_call.1} parent=5 // loop_footer_branch
      %164 = sbr.rel target = $region26
    $region31: #{tpu_custom_call.1} parent=5 // loop_exit
      _
  $region6: #{tpu_custom_call.1} parent=0 // loop_footer
    %s20 = sadd.s32 1, %s16
  $region7: #{tpu_custom_call.1} parent=0 // loop_footer_branch
    %15 = sbr.rel target = $region3
  $region8: #{tpu_custom_call.1} parent=0 // loop_exit
    _
  %225 = vsyncmov [#allocation2]
  %s226 = vpop.sfrf %225
  %p227 = scmp.eq.s32.totalorder %s226, 0
  %p228 = pneg %p227
  %230 = shalt.err (%p228)
  %s231 = scalar_lea.sflag [#allocation2], 1
  %232 = vsyncmov %s231
  %s233 = vpop.sfrf %232
  %p234 = scmp.eq.s32.totalorder %s233, 0
  %p235 = pneg %p234
  %237 = shalt.err (%p235)
  %s238 = scalar_lea.sflag [#allocation2], 2
  %239 = vsyncmov %s238
  %s240 = vpop.sfrf %239
  %p241 = scmp.eq.s32.totalorder %s240, 0
  %p242 = pneg %p241
  %244 = shalt.err (%p242)
  %s245 = scalar_lea.sflag [#allocation2], 3
  %246 = vsyncmov %s245
  %s247 = vpop.sfrf %246
  %p248 = scmp.eq.s32.totalorder %s247, 0
  %p249 = pneg %p248
  %251 = shalt.err (%p249)

</llo_original>
